<compile_context>
chip_gen: v5e
topology: v5e:2x2
jax: 0.10.0
libtpu: 0.0.40
codegen_flags: <defaults>
</compile_context>

<pallas_src>
import functools

import jax
import jax.numpy as jnp
from jax.experimental import pallas as pl
from jax.experimental.pallas import tpu as pltpu


_LANE_COLS = 1024  # multiple of 128 -> lane-dense, unmasked vst on full blocks


@functools.lru_cache(maxsize=1)
def _device_tuning():
    """(tile_rows, bf16_native_ok, use_core_parallel) for the local TPU gen."""
    try:
        kind = jax.devices()[0].device_kind.lower()
    except Exception:  # pragma: no cover - defensive fallback
        kind = ""
    if "7" in kind:                      # v7x: 64 MiB VMEM/TC, ~3.2 TB/s, 2 TCs
        return 2048, True, True
    if "v6" in kind or "6e" in kind:     # v6e (Trillium)
        return 1024, True, False
    return 512, False, False             # v5e and older (16 MiB scoped default)


def _make_kernel(compute_dtype):
    def kernel(factor_ref, off_ref, x_ref, o_ref):
        f = factor_ref[0].astype(compute_dtype)
        b = off_ref[0].astype(compute_dtype)
        x = x_ref[...].astype(compute_dtype)
        o_ref[...] = jnp.clip(x * f + b, 0.0, 1.0).astype(o_ref.dtype)

    return kernel


def _linear_transform_impl(x, factor, off):
    orig_shape = x.shape
    orig_dtype = x.dtype
    n = x.size

    tile_rows_max, bf16_ok, core_par = _device_tuning()
    if orig_dtype == jnp.bfloat16 and bf16_ok:
        compute_dtype = jnp.bfloat16
    else:
        compute_dtype = jnp.float32

    factor_c = jnp.asarray(factor, jnp.float32)
    off_c = jnp.asarray(off, jnp.float32)
    factor_arr = factor_c.reshape(1)
    off_arr = off_c.reshape(1)

    flat = x.reshape(-1)  # copy-free reshape of a contiguous array
    cols = _LANE_COLS
    bulk_rows = n // cols          # rows covered by the Pallas stream
    bulk = bulk_rows * cols
    rem = n - bulk                 # < 1024 leftover elements (if any)

    parts = []

    if bulk_rows > 0:
        x2d = flat[:bulk].reshape(bulk_rows, cols)

        if bulk_rows <= tile_rows_max:
            tile_rows = bulk_rows          # single full-extent block (always legal)
        else:
            tile_rows = tile_rows_max      # ragged last block is masked by Pallas
        grid = (pl.cdiv(bulk_rows, tile_rows),)

        if core_par and grid[0] >= 2:
            dim_sems = (pltpu.CORE_PARALLEL,)   # shard row tiles across v7x's 2 TCs
        else:
            dim_sems = ("parallel",)

        out2d = pl.pallas_call(
            _make_kernel(compute_dtype),
            out_shape=jax.ShapeDtypeStruct((bulk_rows, cols), orig_dtype),
            grid=grid,
            in_specs=[
                pl.BlockSpec(memory_space=pltpu.MemorySpace.SMEM),  # factor
                pl.BlockSpec(memory_space=pltpu.MemorySpace.SMEM),  # off
                pl.BlockSpec((tile_rows, cols), lambda i: (i, 0)),
            ],
            out_specs=pl.BlockSpec((tile_rows, cols), lambda i: (i, 0)),
            compiler_params=pltpu.CompilerParams(
                dimension_semantics=dim_sems,
                vmem_limit_bytes=48 << 20,
            ),
        )(factor_arr, off_arr, x2d)
        parts.append(out2d.reshape(-1))

    if rem > 0:
        # Sub-one-row tail: a Pallas launch would be pure overhead here.
        tail = flat[bulk:].astype(compute_dtype)
        tail_out = jnp.clip(
            tail * factor_c.astype(compute_dtype) + off_c.astype(compute_dtype),
            0.0, 1.0,
        ).astype(orig_dtype)
        parts.append(tail_out)

    out_flat = parts[0] if len(parts) == 1 else jnp.concatenate(parts)
    return out_flat.reshape(orig_shape)


# jit at the definition site: avoids eager per-op dispatch around the pallas_call;
# factor/off are traced operands, so changing their values never recompiles.
linear_transform = jax.jit(_linear_transform_impl)


def linear_transform_ref(x, factor=1.0, off=0.0):
    return jnp.clip(x * factor + off, 0.0, 1.0)


# TODO(synk): LinearTransform.inverse ((e - off) / factor) not implemented; only the
# forward pass is required here.


if __name__ == "__main__":
    key = jax.random.PRNGKey(0)
    factor, off = 0.5, 0.25

    # NCHW input, as the PyTorch module would see from a conv pipeline.
    x = jax.random.normal(key, (2, 4, 16, 16), dtype=jnp.float32)  # 2048 elems
    y = jax.block_until_ready(linear_transform(x, factor, off))
    y_ref = linear_transform_ref(x, factor=factor, off=off)
    assert y.shape == x.shape and y.dtype == x.dtype
    assert jnp.allclose(y, y_ref, atol=1e-6, rtol=1e-6)

    # Non-lane-aligned size exercises the bulk + jnp remainder path (no pad copy).
    x2 = jax.random.normal(jax.random.PRNGKey(1), (3, 5, 7, 11), dtype=jnp.float32)
    y2 = jax.block_until_ready(linear_transform(x2, factor, off))
    y2_ref = linear_transform_ref(x2, factor=factor, off=off)
    assert y2.shape == x2.shape and y2.dtype == x2.dtype
    assert jnp.allclose(y2, y2_ref, atol=1e-6, rtol=1e-6)

    print("KERNEL_OK")
</pallas_src>

<mosaic_0001>
module attributes {stable_mosaic.version = 11 : i64} {
  func.func @kernel(%arg0: i32, %arg1: memref<1xf32, #tpu.memory_space<smem>>, %arg2: memref<1xf32, #tpu.memory_space<smem>>, %arg3: memref<2x1024xf32, #tpu.memory_space<vmem>>, %arg4: memref<2x1024xf32, #tpu.memory_space<vmem>>) attributes {dimension_semantics = [#tpu.dimension_semantics<parallel>], iteration_bounds = array<i64: 1>, scalar_prefetch = 0 : i64, scratch_operands = 0 : i64, tpu.core_type = #tpu.core_type<tc>, window_params = [{transform_indices = @transform_0, window_bounds = array<i64: 1>}, {transform_indices = @transform_1, window_bounds = array<i64: 1>}, {transform_indices = @transform_2, window_bounds = array<i64: 2, 1024>}, {transform_indices = @transform_3, window_bounds = array<i64: 2, 1024>}]} {
    %c0 = arith.constant 0 : index
    %0 = memref.load %arg1[%c0] : memref<1xf32, #tpu.memory_space<smem>>
    %c0_0 = arith.constant 0 : index
    %1 = memref.load %arg2[%c0_0] : memref<1xf32, #tpu.memory_space<smem>>
    %c0_1 = arith.constant 0 : index
    %c0_2 = arith.constant 0 : index
    %2 = vector.load %arg3[%c0_1, %c0_2] : memref<2x1024xf32, #tpu.memory_space<vmem>>, vector<2x1024xf32>
    %3 = vector.broadcast %0 : f32 to vector<2x1024xf32>
    %4 = arith.mulf %2, %3 : vector<2x1024xf32>
    %5 = vector.broadcast %1 : f32 to vector<2x1024xf32>
    %6 = arith.addf %4, %5 : vector<2x1024xf32>
    %cst = arith.constant 0.000000e+00 : f32
    %cst_3 = arith.constant 1.000000e+00 : f32
    %7 = vector.broadcast %cst : f32 to vector<2x1024xf32>
    %8 = arith.maximumf %7, %6 : vector<2x1024xf32>
    %9 = vector.broadcast %cst_3 : f32 to vector<2x1024xf32>
    %10 = arith.minimumf %9, %8 : vector<2x1024xf32>
    %c0_4 = arith.constant 0 : index
    %c0_5 = arith.constant 0 : index
    %11 = vector.load %arg4[%c0_4, %c0_5] : memref<2x1024xf32, #tpu.memory_space<vmem>>, vector<2x1024xf32>
    tpu.vector_store %arg4[%c0_4, %c0_5], %10 {strides = array<i32>} : memref<2x1024xf32, #tpu.memory_space<vmem>>, vector<2x1024xf32>,
    return
  }
  func.func @transform_0(%arg0: i32) -> i32 {
    %c0_i32 = arith.constant 0 : i32
    %c0_i32_0 = arith.constant 0 : i32
    return %c0_i32 : i32
  }
  func.func @transform_1(%arg0: i32) -> i32 {
    %c0_i32 = arith.constant 0 : i32
    %c0_i32_0 = arith.constant 0 : i32
    return %c0_i32 : i32
  }
  func.func @transform_2(%arg0: i32) -> (i32, i32) {
    %c0_i32 = arith.constant 0 : i32
    %c0_i32_0 = arith.constant 0 : i32
    return %arg0, %c0_i32 : i32, i32
  }
  func.func @transform_3(%arg0: i32) -> (i32, i32) {
    %c0_i32 = arith.constant 0 : i32
    %c0_i32_0 = arith.constant 0 : i32
    return %arg0, %c0_i32 : i32, i32
  }
}

</mosaic_0001>

<llo_original>
// kernel: _linear_transform_impl.1
$region0: #{_linear_transform_impl.1}
  #allocation0 [shape = 'u32[]', space=smem, size = 0x4, offset = 0x4, fixed_abs, tag = 'smem constant byte address 0x4 - core index']
  #allocation1 [shape = 'u32[72,128]{1,0:T(1,128)}', space=vmem, size = 0x9000, scoped, tag = 'internal scratch']
  #allocation2 [shape = 'f32[1]{0:T(128)S(6)}', space=smem, size = 0x200, scoped, tag = 'scoped memory for _linear_transform_impl.1']
  #allocation3 [shape = 'f32[1]{0:T(128)S(6)}', space=smem, size = 0x200, scoped, tag = 'scoped memory for _linear_transform_impl.1']
  %s0 = inlined_call_operand.<no memory space> [shape: f32[1], index: 0, kind: input, shape index: {}]
  %s1 = inlined_call_operand.<no memory space> [shape: f32[1], index: 1, kind: input, shape index: {}]
  %s2 = inlined_call_operand.vmem [shape: f32[2,1024], index: 2, kind: input, shape index: {}]
  %s3 = inlined_call_operand.vmem [shape: f32[2,1024], index: 3, kind: output, shape index: {}]
  %s4 = sld [smem:[#allocation0]]
  $region22: #{_linear_transform_impl.1} parent=0
    _
  %s6 = ssub.s32 1, %s4
  %s7 = scalar_select 0, %s6, %s4
  %8 = sst [smem:[#allocation2]] %s0
  %9 = sst [smem:[#allocation3]] %s1
  // Predicated region
  $region2: #{_linear_transform_impl.1} parent=0 // pred_check
    _
  $region3: #{_linear_transform_impl.1} parent=0 // pred_check_branch
    %11 = sbr.rel (0) target = $region5
  $region4: #{_linear_transform_impl.1} parent=0 // pred_region
    _
  $region5: #{_linear_transform_impl.1} parent=0 // pred_fallthru
    _
  // Predicated region
  $region6: #{_linear_transform_impl.1} parent=0 // pred_check
    _
  $region7: #{_linear_transform_impl.1} parent=0 // pred_check_branch
    %13 = sbr.rel (0) target = $region9
  $region8: #{_linear_transform_impl.1} parent=0 // pred_region
    _
  $region9: #{_linear_transform_impl.1} parent=0 // pred_fallthru
    _
  // Predicated region
  $region10: #{_linear_transform_impl.1} parent=0 // pred_check
    _
  $region11: #{_linear_transform_impl.1} parent=0 // pred_check_branch
    %15 = sbr.rel (0) target = $region13
  $region12: #{_linear_transform_impl.1} parent=0 // pred_region
    _
  $region13: #{_linear_transform_impl.1} parent=0 // pred_fallthru
    _
  %s16 = sld [smem:[#allocation2]]
  %s17 = sld [smem:[#allocation3]]
  %v18 = vld [vmem:[%s2] sm:$0xff]
  %v19 = vld [vmem:[%s2 + $0x8] sm:$0xff]
  %v20 = vstv %s16
  %v21 = vmul.f32 %v18, %v20
  %v22 = vmul.f32 %v19, %v20
  %v23 = vstv %s17
  %v24 = vadd.f32 %v21, %v23
  %v25 = vadd.f32 %v22, %v23
  %v26 = vmax.f32 %v24, 0.0
  %v27 = vmax.f32 %v25, 0.0
  %v28 = vmin.f32 %v26, 1.0
  %v29 = vmin.f32 %v27, 1.0
  %30 = vst [vmem:[%s3] sm:$0xff] %v28
  %31 = vst [vmem:[%s3 + $0x8] sm:$0xff] %v29
  // Predicated region
  $region14: #{_linear_transform_impl.1} parent=0 // pred_check
    _
  $region15: #{_linear_transform_impl.1} parent=0 // pred_check_branch
    %33 = sbr.rel (0) target = $region17
  $region16: #{_linear_transform_impl.1} parent=0 // pred_region
    _
  $region17: #{_linear_transform_impl.1} parent=0 // pred_fallthru
    _
  // Predicated region
  $region18: #{_linear_transform_impl.1} parent=0 // pred_check
    _
  $region19: #{_linear_transform_impl.1} parent=0 // pred_check_branch
    %35 = sbr.rel (0) target = $region21
  $region20: #{_linear_transform_impl.1} parent=0 // pred_region
    _
  $region21: #{_linear_transform_impl.1} parent=0 // pred_fallthru
    _

</llo_original>
